<compile_context>
chip_gen: v7x
topology: tpu7x:2x2x1
jax: 0.10.0
libtpu: 0.0.40
codegen_flags: <defaults>
</compile_context>

<pallas_src>
import functools

import numpy as np
import jax
import jax.numpy as jnp
from jax.experimental import pallas as pl
from jax.experimental.pallas import tpu as pltpu


def _ceil_to(a, m):
    return -(-a // m) * m


def _categorical_activation_kernel(perm_ref, x_ref, bnd_ref, code_ref, o_ref, *,
                                   num_classes, nc1):
    """perm_ref: SMEM (num_classes,) i32  -- randperm(num_classes) (scalar prefetch)
       x_ref:    VMEM (tS, tBH) f32       -- raw input tile (lane-dense)
       bnd_ref:  VMEM (max(nc1,1), tBH)   -- raw class-boundary values (per-BH-tile)
       code_ref: VMEM (1, tBH) f32        -- 0 = plain, 1 = categorical, 2 = cat+ordered
       o_ref:    VMEM (tS, tBH) f32
    """
    x = x_ref[...]
    # Softsign via EUP reciprocal.  approx=False keeps the Newton-Raphson
    # refinement so the result matches an exact 1/(1+|x|) to ~1 ulp (needed to
    # stay within the f32 reference tolerance; approx=True would shave ~2-3
    # VALU ops/elem if last-ulp fidelity were not required).
    y = x * pl.reciprocal(1.0 + jnp.abs(x), approx=False)

    # Boundaries are raw x samples.  Softsign them with the *identical* op
    # sequence so exact ties (a boundary sampled from the same element) compare
    # as "not greater", matching the PyTorch module.  The block is tiny
    # ((nc1p, tBH)), so recomputing per grid step is <= nc1/tS overhead and
    # avoids a megacore-unsafe program_id-gated scratch init.
    b_raw = bnd_ref[...]
    b_soft = b_raw * pl.reciprocal(1.0 + jnp.abs(b_raw), approx=False)

    # Per element: count how many class boundaries it strictly exceeds.
    # Centering (count - num_classes/2) is folded into the accumulator init.
    # nc1 = num_classes - 1 <= 8 is static -> Python loop unrolls.
    cnt = jnp.full(y.shape, -num_classes / 2.0, jnp.float32)
    for k in range(nc1):
        cnt = cnt + (y > b_soft[k:k + 1, :]).astype(jnp.float32)

    code = code_ref[...]                       # (1, tBH), broadcasts over tS rows
    cat_m = code >= 0.5
    ord_m = code >= 1.5

    y_cat = jnp.where(cat_m, cnt, y)

    # randomize_classes: value == i -> perm[i]; anything else -> 0.
    # Centered categorical values live in [-nc/2, nc/2 - 1]:
    #   * odd  num_classes -> half-integers, no class index ever matches,
    #   * even num_classes -> only i in [0, num_classes/2) can match,
    # so the dead comparisons are pruned (bit-identical to the full loop).
    n_match = num_classes // 2 if num_classes % 2 == 0 else 0
    remap = jnp.zeros_like(y_cat)
    for i in range(n_match):
        pv = perm_ref[i].astype(jnp.float32)
        remap = jnp.where(y_cat == float(i), pv, remap)

    o_ref[...] = jnp.where(ord_m, remap, y_cat)


def categorical_activation(x, boundaries_raw, cat_mask, ord_mask, perm,
                           num_classes):
    S, B, H = x.shape
    BH = B * H
    nc1 = num_classes - 1
    nc1p = max(nc1, 1)

    # Lane-dense layout: collapse trailing (B, H) -> B*H (free layout plumbing).
    x2 = x.reshape(S, BH).astype(jnp.float32)
    bnd2 = boundaries_raw.reshape(nc1p, BH).astype(jnp.float32)
    # Fold the two masks into one code array: 0 none, 1 categorical, 2 cat+ordered
    # (ordered is already ANDed with categorical by the caller / module).
    code2 = (cat_mask.astype(jnp.float32)
             + ord_mask.astype(jnp.float32)).reshape(1, BH)
    perm_i32 = jnp.asarray(perm).astype(jnp.int32)

    # ---- tiling -------------------------------------------------------------
    # Lane (BH) tile: multiple of 128, capped at 32K lanes so the per-tile
    # boundary block stays <= nc1p*32768*4 ~= 1 MiB.
    tbh = min(_ceil_to(BH, 128), 32768)
    BH_p = _ceil_to(BH, tbh)
    n_bh = BH_p // tbh

    # Sublane (S) tile: target ~4 MiB per x block, multiple of 8, never larger
    # than (8-padded) S.  Budget: 2*x + 2*out + 2*bnd + 2*code blocks ~= 18 MiB
    # worst case, under the explicit 32 MiB VMEM limit on all generations.
    S_p8 = _ceil_to(S, 8)
    ts = (4 << 20) // (tbh * 4)
    ts = max(8, min(1024, (ts // 8) * 8))
    ts = min(ts, S_p8)
    n_s = -(-S_p8 // ts)
    if n_bh * n_s < 2 and S_p8 >= 16:
        # Guarantee >=2 grid steps (software pipelining + v7x 2-TC sharding)
        # whenever S is big enough that the padding cost is negligible.
        ts = _ceil_to(-(-S_p8 // 2), 8)
    S_p = _ceil_to(S, ts)

    # Zero-pad to tile multiples (padded lanes get code 0 -> plain softsign(0)=0;
    # padded rows are sliced off below).
    if (S_p, BH_p) != (S, BH):
        x2 = jnp.pad(x2, ((0, S_p - S), (0, BH_p - BH)))
        bnd2 = jnp.pad(bnd2, ((0, 0), (0, BH_p - BH)))
        code2 = jnp.pad(code2, ((0, 0), (0, BH_p - BH)))

    grid = (BH_p // tbh, S_p // ts)   # BH outer: bnd/code block reused across inner S steps

    kernel = functools.partial(_categorical_activation_kernel,
                               num_classes=num_classes, nc1=nc1)
    out = pl.pallas_call(
        kernel,
        out_shape=jax.ShapeDtypeStruct((S_p, BH_p), jnp.float32),
        grid_spec=pltpu.PrefetchScalarGridSpec(
            num_scalar_prefetch=1,                     # perm table -> SMEM
            grid=grid,
            in_specs=[
                pl.BlockSpec((ts, tbh), lambda j, i, perm: (i, j)),     # x tile
                pl.BlockSpec((nc1p, tbh), lambda j, i, perm: (0, j)),   # boundaries
                pl.BlockSpec((1, tbh), lambda j, i, perm: (0, j)),      # class code
            ],
            out_specs=pl.BlockSpec((ts, tbh), lambda j, i, perm: (i, j)),
        ),
        compiler_params=pltpu.CompilerParams(
            # Both axes are independent -> shardable across v7x's 2 TensorCores.
            dimension_semantics=("parallel", "parallel"),
            vmem_limit_bytes=32 * 1024 * 1024),
    )(perm_i32, x2, bnd2, code2)
    return out[:S, :BH].reshape(S, B, H)


if __name__ == "__main__":
    S, B, H = 8, 4, 32
    key = jax.random.PRNGKey(0)
    kx, kc, ko = jax.random.split(key, 3)
    x = jax.random.normal(kx, (S, B, H), dtype=jnp.float32) * 2.0

    # ---- deterministic host-side randomness (module __init__/forward RNG) ----
    rng = np.random.default_rng(0)
    zs = np.arange(1, 10)                                   # zipf_sampler_f(0.8, 1, 10)
    w = zs ** (-0.8)
    w = w / w.sum()
    num_classes = int(rng.choice(zs, p=w))
    nc1 = num_classes - 1
    perm = jnp.asarray(rng.permutation(num_classes).astype(np.int32))

    # class_boundaries[:, b, h] = x[randint(0, S, (nc1,)), b, h]  (raw x; softsign in-kernel)
    ind = jnp.asarray(rng.integers(0, S, size=(max(nc1, 1), B, H)),
                      dtype=jnp.int32)
    boundaries_raw = jnp.take_along_axis(x, ind, axis=0)

    cat_mask = jax.random.uniform(kc, (B, H)) < 0.1         # categorical_p
    ord_mask = jnp.logical_and(jax.random.uniform(ko, (B, H)) < 0.7, cat_mask)

    # ---- run kernel ----
    out = categorical_activation(x, boundaries_raw, cat_mask, ord_mask, perm,
                                 num_classes)
    out = jax.block_until_ready(out)

    # ---- pure-numpy reference (full, un-pruned remap loop; same softsign form) ----
    def softsign(v):
        v = np.asarray(v, np.float32)
        return (v * (np.float32(1.0) / (np.float32(1.0) + np.abs(v)))).astype(np.float32)

    xn = np.asarray(x)
    bn = np.asarray(boundaries_raw)
    cm = np.asarray(cat_mask)
    om = np.asarray(ord_mask)
    pm = np.asarray(perm).astype(np.float32)

    y = softsign(xn)
    bs = softsign(bn)
    if nc1 > 0:
        cnt = (y[None] > bs[:nc1, None]).sum(0).astype(np.float32)
    else:
        cnt = np.zeros_like(y)
    ref = np.where(cm[None], cnt - num_classes / 2.0, y)
    remap = np.zeros_like(ref)
    for i in range(num_classes):
        remap = np.where(ref == np.float32(i), pm[i], remap)
    ref = np.where(om[None], remap, ref)

    np.testing.assert_allclose(np.asarray(out), ref, rtol=1e-5, atol=1e-5)
    print("KERNEL_OK")
</pallas_src>

<mosaic_0001>
module attributes {stable_mosaic.version = 11 : i64} {
  func.func @_categorical_activation_kernel(%arg0: i32, %arg1: i32, %arg2: memref<4xi32, #tpu.memory_space<smem>>, %arg3: memref<8x128xf32, #tpu.memory_space<vmem>>, %arg4: memref<3x128xf32, #tpu.memory_space<vmem>>, %arg5: memref<1x128xf32, #tpu.memory_space<vmem>>, %arg6: memref<8x128xf32, #tpu.memory_space<vmem>>) attributes {dimension_semantics = [#tpu.dimension_semantics<parallel>, #tpu.dimension_semantics<parallel>], iteration_bounds = array<i64: 1, 1>, scalar_prefetch = 1 : i64, scratch_operands = 0 : i64, tpu.core_type = #tpu.core_type<tc>, window_params = [{transform_indices = @transform_0, window_bounds = array<i64: 8, 128>}, {transform_indices = @transform_1, window_bounds = array<i64: 3, 128>}, {transform_indices = @transform_2, window_bounds = array<i64: 1, 128>}, {transform_indices = @transform_3, window_bounds = array<i64: 8, 128>}]} {
    %c0 = arith.constant 0 : index
    %c0_0 = arith.constant 0 : index
    %0 = vector.load %arg3[%c0, %c0_0] : memref<8x128xf32, #tpu.memory_space<vmem>>, vector<8x128xf32>
    %1 = math.absf %0 : vector<8x128xf32>
    %cst = arith.constant 1.000000e+00 : f32
    %2 = vector.broadcast %cst : f32 to vector<8x128xf32>
    %3 = arith.addf %2, %1 : vector<8x128xf32>
    %4 = tpu.reciprocal %3 : vector<8x128xf32> -> vector<8x128xf32>
    %5 = arith.mulf %0, %4 : vector<8x128xf32>
    %c0_1 = arith.constant 0 : index
    %c0_2 = arith.constant 0 : index
    %6 = vector.load %arg4[%c0_1, %c0_2] : memref<3x128xf32, #tpu.memory_space<vmem>>, vector<3x128xf32>
    %7 = math.absf %6 : vector<3x128xf32>
    %cst_3 = arith.constant 1.000000e+00 : f32
    %8 = vector.broadcast %cst_3 : f32 to vector<3x128xf32>
    %9 = arith.addf %8, %7 : vector<3x128xf32>
    %10 = tpu.reciprocal %9 : vector<3x128xf32> -> vector<3x128xf32>
    %11 = arith.mulf %6, %10 : vector<3x128xf32>
    %cst_4 = arith.constant -2.000000e+00 : f32
    %12 = vector.broadcast %cst_4 : f32 to vector<8x128xf32>
    %13 = vector.extract_strided_slice %11 {offsets = [0, 0], sizes = [1, 128], strides = [1, 1]} : vector<3x128xf32> to vector<1x128xf32>
    %14 = vector.broadcast %13 : vector<1x128xf32> to vector<8x128xf32>
    %15 = arith.cmpf ogt, %5, %14 : vector<8x128xf32>
    %16 = arith.extui %15 : vector<8x128xi1> to vector<8x128xi32>
    %17 = arith.sitofp %16 : vector<8x128xi32> to vector<8x128xf32>
    %18 = arith.addf %12, %17 : vector<8x128xf32>
    %19 = vector.extract_strided_slice %11 {offsets = [1, 0], sizes = [1, 128], strides = [1, 1]} : vector<3x128xf32> to vector<1x128xf32>
    %20 = vector.broadcast %19 : vector<1x128xf32> to vector<8x128xf32>
    %21 = arith.cmpf ogt, %5, %20 : vector<8x128xf32>
    %22 = arith.extui %21 : vector<8x128xi1> to vector<8x128xi32>
    %23 = arith.sitofp %22 : vector<8x128xi32> to vector<8x128xf32>
    %24 = arith.addf %18, %23 : vector<8x128xf32>
    %25 = vector.extract_strided_slice %11 {offsets = [2, 0], sizes = [1, 128], strides = [1, 1]} : vector<3x128xf32> to vector<1x128xf32>
    %26 = vector.broadcast %25 : vector<1x128xf32> to vector<8x128xf32>
    %27 = arith.cmpf ogt, %5, %26 : vector<8x128xf32>
    %28 = arith.extui %27 : vector<8x128xi1> to vector<8x128xi32>
    %29 = arith.sitofp %28 : vector<8x128xi32> to vector<8x128xf32>
    %30 = arith.addf %24, %29 : vector<8x128xf32>
    %c0_5 = arith.constant 0 : index
    %c0_6 = arith.constant 0 : index
    %31 = vector.load %arg5[%c0_5, %c0_6] : memref<1x128xf32, #tpu.memory_space<vmem>>, vector<1x128xf32>
    %cst_7 = arith.constant 5.000000e-01 : f32
    %32 = vector.broadcast %cst_7 : f32 to vector<1x128xf32>
    %33 = arith.cmpf oge, %31, %32 : vector<1x128xf32>
    %cst_8 = arith.constant 1.500000e+00 : f32
    %34 = vector.broadcast %cst_8 : f32 to vector<1x128xf32>
    %35 = arith.cmpf oge, %31, %34 : vector<1x128xf32>
    %36 = vector.shape_cast %33 : vector<1x128xi1> to vector<1x128xi1>
    %37 = vector.broadcast %36 : vector<1x128xi1> to vector<8x128xi1>
    %38 = arith.select %37, %30, %5 : vector<8x128xi1>, vector<8x128xf32>
    %cst_9 = arith.constant 0.000000e+00 : f32
    %39 = vector.broadcast %cst_9 : f32 to vector<8x128xf32>
    %c0_10 = arith.constant 0 : index
    %40 = memref.load %arg2[%c0_10] : memref<4xi32, #tpu.memory_space<smem>>
    %41 = arith.sitofp %40 : i32 to f32
    %cst_11 = arith.constant 0.000000e+00 : f32
    %42 = vector.broadcast %cst_11 : f32 to vector<8x128xf32>
    %43 = arith.cmpf oeq, %38, %42 : vector<8x128xf32>
    %44 = vector.broadcast %41 : f32 to vector<8x128xf32>
    %45 = arith.select %43, %44, %39 : vector<8x128xi1>, vector<8x128xf32>
    %c1 = arith.constant 1 : index
    %46 = memref.load %arg2[%c1] : memref<4xi32, #tpu.memory_space<smem>>
    %47 = arith.sitofp %46 : i32 to f32
    %cst_12 = arith.constant 1.000000e+00 : f32
    %48 = vector.broadcast %cst_12 : f32 to vector<8x128xf32>
    %49 = arith.cmpf oeq, %38, %48 : vector<8x128xf32>
    %50 = vector.broadcast %47 : f32 to vector<8x128xf32>
    %51 = arith.select %49, %50, %45 : vector<8x128xi1>, vector<8x128xf32>
    %52 = vector.shape_cast %35 : vector<1x128xi1> to vector<1x128xi1>
    %53 = vector.broadcast %52 : vector<1x128xi1> to vector<8x128xi1>
    %54 = arith.select %53, %51, %38 : vector<8x128xi1>, vector<8x128xf32>
    %c0_13 = arith.constant 0 : index
    %c0_14 = arith.constant 0 : index
    %55 = vector.load %arg6[%c0_13, %c0_14] : memref<8x128xf32, #tpu.memory_space<vmem>>, vector<8x128xf32>
    tpu.vector_store %arg6[%c0_13, %c0_14], %54 {strides = array<i32>} : memref<8x128xf32, #tpu.memory_space<vmem>>, vector<8x128xf32>,
    return
  }
  func.func @transform_0(%arg0: i32, %arg1: i32, %arg2: memref<4xi32, #tpu.memory_space<smem>>) -> (i32, i32) {
    %c0_i32 = arith.constant 0 : i32
    return %arg1, %arg0 : i32, i32
  }
  func.func @transform_1(%arg0: i32, %arg1: i32, %arg2: memref<4xi32, #tpu.memory_space<smem>>) -> (i32, i32) {
    %c0_i32 = arith.constant 0 : i32
    %c0_i32_0 = arith.constant 0 : i32
    return %c0_i32, %arg0 : i32, i32
  }
  func.func @transform_2(%arg0: i32, %arg1: i32, %arg2: memref<4xi32, #tpu.memory_space<smem>>) -> (i32, i32) {
    %c0_i32 = arith.constant 0 : i32
    %c0_i32_0 = arith.constant 0 : i32
    return %c0_i32, %arg0 : i32, i32
  }
  func.func @transform_3(%arg0: i32, %arg1: i32, %arg2: memref<4xi32, #tpu.memory_space<smem>>) -> (i32, i32) {
    %c0_i32 = arith.constant 0 : i32
    return %arg1, %arg0 : i32, i32
  }
}

</mosaic_0001>

<llo_original>
// kernel: tpu_custom_call.1
$region0: #{tpu_custom_call.1}
  #allocation0 [shape = 'u32[]', space=smem, size = 0x4, offset = 0x4, fixed_abs, tag = 'smem constant byte address 0x4 - core index']
  #allocation1 [shape = 'u32[144,128]{1,0:T(1,128)}', space=vmem, size = 0x12000, scoped, tag = 'internal scratch']
  #allocation2 [shape = 's32[1]{0}', space=sflag, size = 0x4, scoped, tag = 'scoped memory for tpu_custom_call.1']
  #allocation3 [shape = 'u8[512]{0}', space=smem, size = 0x200, scoped, tag = 'prefetched SMEM operand 0']
  %s0 = inlined_call_operand.hbm [shape: s32[4], index: 0, kind: input, shape index: {}]
  %s1 = inlined_call_operand.hbm [shape: f32[8,128], index: 1, kind: input, shape index: {}]
  %s2 = inlined_call_operand.vmem [shape: f32[3,128], index: 2, kind: input, shape index: {}]
  %s3 = inlined_call_operand.vmem [shape: f32[1,128], index: 3, kind: input, shape index: {}]
  %s4 = inlined_call_operand.hbm [shape: f32[8,128], index: 4, kind: output, shape index: {}]
  %s5 = sld [smem:[#allocation0]]
  $region26: #{tpu_custom_call.1} parent=0
    _
  %s7 = ssub.s32 1, %s5
  %s8 = scalar_select 0, %s7, %s5
  %10 = dma.hbm_to_smem %s0, 16, [#allocation3], [#allocation2]
  %11 = dma.done [#allocation2], 16
  %12 = sfence
  $region1: #{tpu_custom_call.1} parent=0
    #allocation4 [shape = 'u8[4096]{0}', space=vmem, size = 0x1000, scoped, tag = 'input window, operand 1, single buffered']
    #allocation5 [shape = 's32[1]{0}', space=sflag, size = 0x4, scoped, tag = 'scoped memory for tpu_custom_call.1']
    #allocation6 [shape = 's32[1]{0}', space=sflag, size = 0x4, scoped, tag = 'scoped memory for tpu_custom_call.1']
    #allocation7 [shape = 'u8[4096]{0}', space=vmem, size = 0x1000, scoped, tag = 'output window, operand 0, single buffered']
    %13 = vsyncpa [#allocation5], 0
    %14 = vsyncpa [#allocation6], 0
    // Predicated region
    $region2: #{tpu_custom_call.1} parent=1 // pred_check
      _
    $region3: #{tpu_custom_call.1} parent=1 // pred_check_branch
      %16 = sbr.rel (0) target = $region5
    $region4: #{tpu_custom_call.1} parent=1 // pred_region
      %s18 = ssub.s32 128, 128
      %19 = vsyncadd [#allocation5], %s18
      %s21 = sshll.u32 [#allocation4], 4
      %s22 = int_to_ptr.vmem [resolvable:$true] %s21
      %24 = dma.hbm_to_vmem [thread:$0]  %s1, 128, %s22, [#allocation5]
    $region5: #{tpu_custom_call.1} parent=1 // pred_fallthru
      _
    // Predicated region
    $region6: #{tpu_custom_call.1} parent=1 // pred_check
      _
    $region7: #{tpu_custom_call.1} parent=1 // pred_check_branch
      %26 = sbr.rel (0) target = $region9
    $region8: #{tpu_custom_call.1} parent=1 // pred_region
      _
    $region9: #{tpu_custom_call.1} parent=1 // pred_fallthru
      _
    // Predicated region
    $region10: #{tpu_custom_call.1} parent=1 // pred_check
      _
    $region11: #{tpu_custom_call.1} parent=1 // pred_check_branch
      %28 = sbr.rel (0) target = $region13
    $region12: #{tpu_custom_call.1} parent=1 // pred_region
      _
    $region13: #{tpu_custom_call.1} parent=1 // pred_fallthru
      _
    // Predicated region
    $region14: #{tpu_custom_call.1} parent=1 // pred_check
      _
    $region15: #{tpu_custom_call.1} parent=1 // pred_check_branch
      %30 = sbr.rel (0) target = $region17
    $region16: #{tpu_custom_call.1} parent=1 // pred_region
      %31 = dma.done [#allocation5], 128
    $region17: #{tpu_custom_call.1} parent=1 // pred_fallthru
      _
    %v32 = vld [vmem:[#allocation4] sm:$0xff]
    %v33 = vand.u32 2147483647, %v32
    %v34 = vadd.f32 %v33, 1.0
    %v35 = vrcp.pop %v34
    %v36 = vmul.f32 %v32, %v35
    %v37 = vld [vmem:[%s2] sm:$0x7]
    %v38 = vand.u32 2147483647, %v37
    %v39 = vadd.f32 %v38, 1.0
    %v40 = vrcp.pop %v39
    %v41 = vmul.f32 %v37, %v40
    %v42 = vlaneseq
    %v43 = vshrl.u32 %v42, 7
    %v44 = vsub.s32 0, %v43
    %v45 = vrot.slane %v41, %v44
    %vm46 = vcmp.gt.f32.partialorder %v36, %v45
    %v47 = vsel %vm46, 1, 0
    %v48 = vcvt.s32.f32 %v47
    %v49 = vadd.f32 %v48, -2.0
    %v50 = vlaneseq
    %v51 = vshrl.u32 %v50, 7
    %v52 = vsub.s32 1, %v51
    %v53 = vrot.slane %v41, %v52
    %vm54 = vcmp.gt.f32.partialorder %v36, %v53
    %v55 = vsel %vm54, 1, 0
    %v56 = vcvt.s32.f32 %v55
    %v57 = vadd.f32 %v49, %v56
    %v58 = vlaneseq
    %v59 = vshrl.u32 %v58, 7
    %v60 = vsub.s32 2, %v59
    %v61 = vrot.slane %v41, %v60
    %vm62 = vcmp.gt.f32.partialorder %v36, %v61
    %v63 = vsel %vm62, 1, 0
    %v64 = vcvt.s32.f32 %v63
    %v65 = vadd.f32 %v57, %v64
    %v66 = vld [vmem:[%s3] sm:$0x1]
    %vm67 = vcmp.ge.f32.partialorder %v66, 0.5
    %vm68 = vcmp.ge.f32.partialorder %v66, 1.5
    %v69 = vsel %vm67, 1, 0
    %v70 = vlaneseq
    %v71 = vshrl.u32 %v70, 7
    %v72 = vsub.s32 0, %v71
    %v73 = vrot.slane %v69, %v72
    %vm74 = vcmp.eq.s32.totalorder %v73, 1
    %v75 = vsel %vm74, %v65, %v36
    %s76 = sld [smem:[#allocation3]]
    %s77 = scvt.s32.f32 %s76
    %vm78 = vcmp.eq.f32.partialorder %v75, 0.0
    %v79 = vstv %s77
    %v80 = vsel %vm78, %v79, 0.0
    %s81 = sld [smem:[#allocation3 + $0x1]]
    %s82 = scvt.s32.f32 %s81
    %vm83 = vcmp.eq.f32.partialorder %v75, 1.0
    %v84 = vstv %s82
    %v85 = vsel %vm83, %v84, %v80
    %v86 = vsel %vm68, 1, 0
    %v87 = vlaneseq
    %v88 = vshrl.u32 %v87, 7
    %v89 = vsub.s32 0, %v88
    %v90 = vrot.slane %v86, %v89
    %vm91 = vcmp.eq.s32.totalorder %v90, 1
    %v92 = vsel %vm91, %v85, %v75
    %93 = vst [vmem:[#allocation7] sm:$0xff] %v92
    // Predicated region
    $region18: #{tpu_custom_call.1} parent=1 // pred_check
      _
    $region19: #{tpu_custom_call.1} parent=1 // pred_check_branch
      %95 = sbr.rel (0) target = $region21
    $region20: #{tpu_custom_call.1} parent=1 // pred_region
      %s97 = ssub.s32 128, 128
      %98 = vsyncadd [#allocation6], %s97
      %s100 = sshll.u32 [#allocation7], 4
      %s101 = int_to_ptr.vmem [resolvable:$true] %s100
      %103 = dma.vmem_to_hbm [thread:$0]  %s101, 128, %s4, [#allocation6]
    $region21: #{tpu_custom_call.1} parent=1 // pred_fallthru
      _
    // Predicated region
    $region22: #{tpu_custom_call.1} parent=1 // pred_check
      _
    $region23: #{tpu_custom_call.1} parent=1 // pred_check_branch
      %105 = sbr.rel (0) target = $region25
    $region24: #{tpu_custom_call.1} parent=1 // pred_region
      %106 = dma.done [#allocation6], 128
    $region25: #{tpu_custom_call.1} parent=1 // pred_fallthru
      _
    %107 = vsyncpa [#allocation5], 1
    %108 = vsyncpa [#allocation6], 1

</llo_original>
